<compile_context>
chip_gen: v5e
topology: v5e:2x2
jax: 0.10.0
libtpu: 0.0.40
codegen_flags: <defaults>
</compile_context>

<pallas_src>
import jax
import jax.numpy as jnp
import numpy as np
from jax.experimental import pallas as pl
from jax.experimental.pallas import tpu as pltpu


def _bit2num_kernel(x_ref, s_ref, o_ref):
    # x_ref: (TB, N*B) bits, s_ref: (N*B, TN) weighted selector, o_ref: (TB, TN)
    o_ref[...] = jnp.dot(
        x_ref[...], s_ref[...], preferred_element_type=jnp.float32
    ).astype(o_ref.dtype)


def _bit2num_matrix(n, B):
    """Selector with embedded bit weights: S[j*B + i, j] = 2**(B-1-i)."""
    rows = np.arange(n * B)
    cols = np.arange(n)
    sel = (rows[:, None] // B) == cols[None, :]
    weights = (2.0 ** (B - 1 - (rows % B))).astype(np.float32)
    return jnp.asarray(sel.astype(np.float32) * weights[:, None])


def dequantization_layer(x, B):
    """Forward of DequantizationLayer(B). x: (batch, N*B) -> (batch, N) f32."""
    b, c = x.shape
    assert c % B == 0, (c, B)
    n = c // B
    x = x.astype(jnp.float32)
    s = _bit2num_matrix(n, B)

    # Tile sizes: full dim when small (satisfies the (8,128) rule via
    # "equal to full array dim"), otherwise aligned tiles.  Budget keeps
    # 2*(x_tile + out_tile) + 2*s_tile well under 16 MiB scoped VMEM.
    tb = b if b <= 512 else 512          # multiple of 8 when tiled
    tn = n if n <= 512 else 512          # multiple of 128 when tiled

    grid = (pl.cdiv(b, tb), pl.cdiv(n, tn))
    return pl.pallas_call(
        _bit2num_kernel,
        out_shape=jax.ShapeDtypeStruct((b, n), jnp.float32),
        grid=grid,
        in_specs=[
            pl.BlockSpec((tb, c), lambda i, j: (i, 0)),   # x tile: resident over j
            pl.BlockSpec((c, tn), lambda i, j: (0, j)),   # selector tile
        ],
        out_specs=pl.BlockSpec((tb, tn), lambda i, j: (i, j)),
        compiler_params=pltpu.CompilerParams(
            dimension_semantics=("parallel", "parallel")),
    )(x, s)


def _reference(x, B):
    """Pure-JAX mirror of torch Bit2Num(x, B)."""
    b, c = x.shape
    n = c // B
    bits = x.astype(jnp.float32).reshape(b, n, B)
    w = 2.0 ** jnp.arange(B - 1, -1, -1, dtype=jnp.float32)
    return jnp.sum(bits * w[None, None, :], axis=-1)


if __name__ == "__main__":
    B = 4
    batch, n = 2, 32
    c = n * B  # 128 input bits per row

    key = jax.random.PRNGKey(0)
    x = jax.random.bernoulli(key, 0.5, (batch, c)).astype(jnp.float32)

    out = dequantization_layer(x, B)
    out = jax.block_until_ready(out)

    ref = _reference(x, B)
    assert out.shape == (batch, n), out.shape
    assert out.dtype == jnp.float32, out.dtype
    np.testing.assert_array_equal(np.asarray(out), np.asarray(ref))
    print("KERNEL_OK")
</pallas_src>

<mosaic_0001>
module attributes {stable_mosaic.version = 11 : i64} {
  func.func @_bit2num_kernel(%arg0: i32, %arg1: i32, %arg2: memref<2x128xf32, #tpu.memory_space<vmem>>, %arg3: memref<128x32xf32, #tpu.memory_space<vmem>>, %arg4: memref<2x32xf32, #tpu.memory_space<vmem>>) attributes {dimension_semantics = [#tpu.dimension_semantics<parallel>, #tpu.dimension_semantics<parallel>], iteration_bounds = array<i64: 1, 1>, scalar_prefetch = 0 : i64, scratch_operands = 0 : i64, tpu.core_type = #tpu.core_type<tc>, window_params = [{transform_indices = @transform_0, window_bounds = array<i64: 2, 128>}, {transform_indices = @transform_1, window_bounds = array<i64: 128, 32>}, {transform_indices = @transform_2, window_bounds = array<i64: 2, 32>}]} {
    %c0 = arith.constant 0 : index
    %c0_0 = arith.constant 0 : index
    %0 = vector.load %arg2[%c0, %c0_0] : memref<2x128xf32, #tpu.memory_space<vmem>>, vector<2x128xf32>
    %c0_1 = arith.constant 0 : index
    %c0_2 = arith.constant 0 : index
    %1 = vector.load %arg3[%c0_1, %c0_2] : memref<128x32xf32, #tpu.memory_space<vmem>>, vector<128x32xf32>
    %cst = arith.constant dense<0.000000e+00> : vector<2x32xf32>
    %2 = tpu.matmul %0, %1, %cst {dimension_numbers = #tpu.dot_dimension_numbers<[1], [0], [0], [1], [0, 0, 1, 1], [], []>} : vector<2x128xf32>, vector<128x32xf32>, vector<2x32xf32> -> vector<2x32xf32>
    %c0_3 = arith.constant 0 : index
    %c0_4 = arith.constant 0 : index
    %3 = vector.load %arg4[%c0_3, %c0_4] : memref<2x32xf32, #tpu.memory_space<vmem>>, vector<2x32xf32>
    tpu.vector_store %arg4[%c0_3, %c0_4], %2 {strides = array<i32>} : memref<2x32xf32, #tpu.memory_space<vmem>>, vector<2x32xf32>,
    return
  }
  func.func @transform_0(%arg0: i32, %arg1: i32) -> (i32, i32) {
    %c0_i32 = arith.constant 0 : i32
    %c0_i32_0 = arith.constant 0 : i32
    return %arg0, %c0_i32 : i32, i32
  }
  func.func @transform_1(%arg0: i32, %arg1: i32) -> (i32, i32) {
    %c0_i32 = arith.constant 0 : i32
    %c0_i32_0 = arith.constant 0 : i32
    return %c0_i32, %arg1 : i32, i32
  }
  func.func @transform_2(%arg0: i32, %arg1: i32) -> (i32, i32) {
    %c0_i32 = arith.constant 0 : i32
    return %arg0, %arg1 : i32, i32
  }
}

</mosaic_0001>

<llo_original>
// kernel: tpu_custom_call.1
$region0: #{tpu_custom_call.1}
  #allocation0 [shape = 'u32[]', space=smem, size = 0x4, offset = 0x4, fixed_abs, tag = 'smem constant byte address 0x4 - core index']
  #allocation1 [shape = 'u32[72,128]{1,0:T(1,128)}', space=vmem, size = 0x9000, scoped, tag = 'internal scratch']
  %s0 = inlined_call_operand.vmem [shape: f32[2,128], index: 0, kind: input, shape index: {}]
  %s1 = inlined_call_operand.vmem [shape: f32[128,32], index: 1, kind: input, shape index: {}]
  %s2 = inlined_call_operand.hbm [shape: f32[2,32], index: 2, kind: output, shape index: {}]
  %s3 = sld [smem:[#allocation0]]
  $region18: #{tpu_custom_call.1} parent=0
    _
  %s5 = ssub.s32 1, %s3
  %s6 = scalar_select 0, %s5, %s3
  $region1: #{tpu_custom_call.1} parent=0
    #allocation2 [shape = 'u8[1024]{0}', space=vmem, size = 0x400, scoped, tag = 'output window, operand 0, single buffered']
    #allocation3 [shape = 's32[1]{0}', space=sflag, size = 0x4, scoped, tag = 'scoped memory for tpu_custom_call.1']
    %7 = vsyncpa [#allocation3], 0
    // Predicated region
    $region2: #{tpu_custom_call.1} parent=1 // pred_check
      _
    $region3: #{tpu_custom_call.1} parent=1 // pred_check_branch
      %9 = sbr.rel (0) target = $region5
    $region4: #{tpu_custom_call.1} parent=1 // pred_region
      _
    $region5: #{tpu_custom_call.1} parent=1 // pred_fallthru
      _
    // Predicated region
    $region6: #{tpu_custom_call.1} parent=1 // pred_check
      _
    $region7: #{tpu_custom_call.1} parent=1 // pred_check_branch
      %11 = sbr.rel (0) target = $region9
    $region8: #{tpu_custom_call.1} parent=1 // pred_region
      _
    $region9: #{tpu_custom_call.1} parent=1 // pred_fallthru
      _
    %v12 = vld [vmem:[%s0] sm:$0x3]
    %v13 = vld [vmem:[%s1] sm:$0xff]
    %v14 = vld [vmem:[%s1 + $0x8] sm:$0xff]
    %v15 = vld [vmem:[%s1 + $0x10] sm:$0xff]
    %v16 = vld [vmem:[%s1 + $0x18] sm:$0xff]
    %v17 = vld [vmem:[%s1 + $0x20] sm:$0xff]
    %v18 = vld [vmem:[%s1 + $0x28] sm:$0xff]
    %v19 = vld [vmem:[%s1 + $0x30] sm:$0xff]
    %v20 = vld [vmem:[%s1 + $0x38] sm:$0xff]
    %v21 = vld [vmem:[%s1 + $0x40] sm:$0xff]
    %v22 = vld [vmem:[%s1 + $0x48] sm:$0xff]
    %v23 = vld [vmem:[%s1 + $0x50] sm:$0xff]
    %v24 = vld [vmem:[%s1 + $0x58] sm:$0xff]
    %v25 = vld [vmem:[%s1 + $0x60] sm:$0xff]
    %v26 = vld [vmem:[%s1 + $0x68] sm:$0xff]
    %v27 = vld [vmem:[%s1 + $0x70] sm:$0xff]
    %v28 = vld [vmem:[%s1 + $0x78] sm:$0xff]
    %29 = vmatpush.msra.mxu0 %v28
    %30 = vmatpush.msra.mxu0 %v27
    %31 = vmatpush.msra.mxu0 %v26
    %32 = vmatpush.msra.mxu0 %v25
    %33 = vmatpush.msra.mxu0 %v24
    %34 = vmatpush.msra.mxu0 %v23
    %35 = vmatpush.msra.mxu0 %v22
    %36 = vmatpush.msra.mxu0 %v21
    %37 = vmatpush.msra.mxu0 %v20
    %38 = vmatpush.msra.mxu0 %v19
    %39 = vmatpush.msra.mxu0 %v18
    %40 = vmatpush.msra.mxu0 %v17
    %41 = vmatpush.msra.mxu0 %v16
    %42 = vmatpush.msra.mxu0 %v15
    %43 = vmatpush.msra.mxu0 %v14
    %44 = vmatpush.msra.mxu0 %v13
    %45 = vmatmul.f32.gmra.mxu0 %v12
    %v46 = vpop.f32.mrf.mxu0
    %v47 = vadd.f32 0.0, %v46
    %48 = vdwg.mxu0
    %vm49 = vcmask 254976
    %50 = vst.msk [vmem:[#allocation2] sm:$0x3] %vm49, %v47
    // Predicated region
    $region10: #{tpu_custom_call.1} parent=1 // pred_check
      _
    $region11: #{tpu_custom_call.1} parent=1 // pred_check_branch
      %52 = sbr.rel (0) target = $region13
    $region12: #{tpu_custom_call.1} parent=1 // pred_region
      %54 = vsyncadd [#allocation3], 0
      %s56 = sshll.u32 [#allocation2], 4
      %s57 = int_to_ptr.vmem [resolvable:$true] %s56
      %s58 = sshll.u32 %s2, 4
      %s59 = int_to_ptr.hbm [resolvable:$true] %s58
      %61 = dma.vmem_to_hbm [thread:$0]  %s57, 32, %s59, [#allocation3]
    $region13: #{tpu_custom_call.1} parent=1 // pred_fallthru
      _
    // Predicated region
    $region14: #{tpu_custom_call.1} parent=1 // pred_check
      _
    $region15: #{tpu_custom_call.1} parent=1 // pred_check_branch
      %63 = sbr.rel (0) target = $region17
    $region16: #{tpu_custom_call.1} parent=1 // pred_region
      %65 = dma.done [#allocation3], 32
    $region17: #{tpu_custom_call.1} parent=1 // pred_fallthru
      _
    %66 = vsyncpa [#allocation3], 1

</llo_original>
